<compile_context>
chip_gen: v6e
topology: v6e:2x2x1
jax: 0.10.0
libtpu: 0.0.40
codegen_flags: <defaults>
</compile_context>

<pallas_src>
import functools

import jax
import jax.numpy as jnp
from jax.experimental import pallas as pl
from jax.experimental.pallas import tpu as pltpu

_LANE = 128
_SUBLANE = 8


def _round_up(x, m):
    return ((x + m - 1) // m) * m


def _leaky_relu(x, negative_slope):
    return jnp.where(x >= 0, x, negative_slope * x)


def _make_actor_kernel(num_tail_layers, negative_slope):
    """Fused MLP: LeakyReLU(obs@W1o + eps@W1e + b1) -> ... -> tanh(last)."""

    def kernel(obs_ref, eps_ref, w1o_ref, w1e_ref, b1_ref, *rest):
        o_ref = rest[-1]
        tail = rest[:-1]  # (w2, b2, ..., wN, bN); last layer lane-padded

        def bf16(a):
            return a.astype(jnp.bfloat16)

        # First layer: split matmul replaces the wrapper-side concat([obs, eps]).
        h = (jnp.dot(bf16(obs_ref[...]), bf16(w1o_ref[...]),
                     preferred_element_type=jnp.float32)
             + jnp.dot(bf16(eps_ref[...]), bf16(w1e_ref[...]),
                       preferred_element_type=jnp.float32)
             + b1_ref[...])
        h = _leaky_relu(h, negative_slope)

        for li in range(num_tail_layers):
            w_ref = tail[2 * li]
            b_ref = tail[2 * li + 1]
            h = jnp.dot(bf16(h), bf16(w_ref[...]),
                        preferred_element_type=jnp.float32) + b_ref[...]
            if li < num_tail_layers - 1:
                h = _leaky_relu(h, negative_slope)
            else:
                h = jnp.tanh(h)  # output activation (padded cols: tanh(0)=0)
        o_ref[...] = h.astype(o_ref.dtype)

    return kernel


def _actor_apply(obs, epsilon, params, *, negative_slope=0.2, max_batch_tile=256):
    """obs: (B, obs_dim) f32, epsilon: (B, eps_dim) f32 -> (B, act_dim) f32."""
    obs = obs.astype(jnp.float32)
    epsilon = epsilon.astype(jnp.float32)
    B, obs_dim = obs.shape
    eps_dim = epsilon.shape[1]

    # Split layer-1 weights so the kernel never sees a concatenated input.
    w1, b1 = params[0]
    assert w1.shape[0] == obs_dim + eps_dim
    w1_obs = w1[:obs_dim]
    w1_eps = w1[obs_dim:]

    # Lane-dense output: zero-pad last layer to a multiple of 128 columns.
    w_last, b_last = params[-1]
    act_dim = w_last.shape[1]
    out_pad = _round_up(act_dim, _LANE)
    if out_pad != act_dim:
        w_last = jnp.pad(w_last, ((0, 0), (0, out_pad - act_dim)))
        b_last = jnp.pad(b_last, ((0, 0), (0, out_pad - act_dim)))
    tail = list(params[1:-1]) + [(w_last, b_last)]

    # Batch tiling: whole batch in one grid step when it fits; else big tiles.
    if B <= max_batch_tile:
        Bp = _round_up(B, _SUBLANE)
        batch_tile = Bp
    else:
        batch_tile = max_batch_tile
        Bp = _round_up(B, batch_tile)
    if Bp != B:
        obs = jnp.pad(obs, ((0, Bp - B), (0, 0)))
        epsilon = jnp.pad(epsilon, ((0, Bp - B), (0, 0)))
    grid = (Bp // batch_tile,)

    def tiled(feat):
        return pl.BlockSpec((batch_tile, feat), lambda i: (i, 0))

    def full(arr):
        return pl.BlockSpec(arr.shape, lambda i: (0, 0))  # resident across grid

    in_arrays = [obs, epsilon, w1_obs, w1_eps, b1]
    in_specs = [tiled(obs_dim), tiled(eps_dim),
                full(w1_obs), full(w1_eps), full(b1)]
    for (w, b) in tail:
        in_arrays += [w, b]
        in_specs += [full(w), full(b)]
    out_spec = tiled(out_pad)

    # Advisory cost estimate for XLA scheduling around the custom call.
    flops = 2 * Bp * (obs_dim + eps_dim) * w1.shape[1]
    for (w, _b) in tail:
        flops += 2 * Bp * w.shape[0] * w.shape[1]
    transcendentals = Bp * out_pad  # tanh on the output tile
    bytes_accessed = 4 * (obs.size + epsilon.size + w1_obs.size + w1_eps.size
                          + b1.size
                          + sum(a.size for (w, b) in tail for a in (w, b))
                          + Bp * out_pad)

    kernel = _make_actor_kernel(len(tail), negative_slope)

    out = pl.pallas_call(
        kernel,
        out_shape=jax.ShapeDtypeStruct((Bp, out_pad), jnp.float32),
        grid_spec=pltpu.PrefetchScalarGridSpec(
            num_scalar_prefetch=0,
            grid=grid,
            in_specs=in_specs,
            out_specs=out_spec,
        ),
        compiler_params=pltpu.CompilerParams(
            dimension_semantics=("parallel",)),
        cost_estimate=pl.CostEstimate(
            flops=flops,
            transcendentals=transcendentals,
            bytes_accessed=bytes_accessed),
    )(*in_arrays)

    return out[:B, :act_dim]


def actor_forward(obs, params, key, *, act_dim, std=1.0, noise="gaussian",
                  epsilon_limit=5.0, negative_slope=0.2):
    """Matches GenerativeGaussianMLPActor.forward (noise sampled in wrapper)."""
    B = obs.shape[0]
    eps_dim = act_dim * act_dim
    if noise == "gaussian":
        epsilon = jnp.clip(std * jax.random.normal(key, (B, eps_dim), jnp.float32),
                           -epsilon_limit, epsilon_limit)
    else:
        epsilon = jax.random.uniform(key, (B, eps_dim), jnp.float32) * 2.0 - 1.0
    return _actor_apply(obs, epsilon, params, negative_slope=negative_slope)


def init_params(key, obs_dim, act_dim, hidden_dim):
    """Xavier-uniform init matching the layer sizes of the PyTorch module."""
    eps_dim = act_dim * act_dim
    hidden = list(hidden_dim)
    hidden[0] += eps_dim
    sizes = [obs_dim + eps_dim] + hidden + [act_dim]
    params = []
    for i in range(len(sizes) - 1):
        key, kw = jax.random.split(key)
        fan_in, fan_out = sizes[i], sizes[i + 1]
        bound = float(jnp.sqrt(6.0 / (fan_in + fan_out)))
        w = jax.random.uniform(kw, (fan_in, fan_out), jnp.float32, -bound, bound)
        b = jnp.zeros((1, fan_out), jnp.float32)  # 2D for TPU lane layout
        params.append((w, b))
    return params


if __name__ == "__main__":
    obs_dim, act_dim = 24, 8          # eps_dim = 64
    hidden_dim = (128, 128)           # -> layer sizes [88, 192, 128, 8]
    batch = 16

    key = jax.random.PRNGKey(0)
    k_params, k_obs, k_eps = jax.random.split(key, 3)

    params = init_params(k_params, obs_dim, act_dim, hidden_dim)
    obs = jax.random.normal(k_obs, (batch, obs_dim), jnp.float32)

    out = actor_forward(obs, params, k_eps, act_dim=act_dim)
    out = jax.block_until_ready(out)

    # Pure-JAX reference: same epsilon (same key), same bf16-operand / f32-acc
    # matmul precision, LeakyReLU(0.2) hidden, tanh output.
    eps_dim = act_dim * act_dim
    epsilon = jnp.clip(1.0 * jax.random.normal(k_eps, (batch, eps_dim), jnp.float32),
                       -5.0, 5.0)
    h = jnp.concatenate([obs, epsilon], axis=1)
    for li, (w, b) in enumerate(params):
        h = jnp.dot(h.astype(jnp.bfloat16), w.astype(jnp.bfloat16),
                    preferred_element_type=jnp.float32) + b
        if li < len(params) - 1:
            h = jnp.where(h >= 0, h, 0.2 * h)
        else:
            h = jnp.tanh(h)

    assert out.shape == (batch, act_dim)
    assert jnp.allclose(out, h, atol=2e-2, rtol=2e-2), \
        float(jnp.max(jnp.abs(out - h)))
    print("KERNEL_OK")
</pallas_src>

<mosaic_0001>
module attributes {stable_mosaic.version = 11 : i64} {
  func.func @kernel(%arg0: i32, %arg1: memref<16x24xf32, #tpu.memory_space<vmem>>, %arg2: memref<16x64xf32, #tpu.memory_space<vmem>>, %arg3: memref<24x192xf32, #tpu.memory_space<vmem>>, %arg4: memref<64x192xf32, #tpu.memory_space<vmem>>, %arg5: memref<1x192xf32, #tpu.memory_space<vmem>>, %arg6: memref<192x128xf32, #tpu.memory_space<vmem>>, %arg7: memref<1x128xf32, #tpu.memory_space<vmem>>, %arg8: memref<128x128xf32, #tpu.memory_space<vmem>>, %arg9: memref<1x128xf32, #tpu.memory_space<vmem>>, %arg10: memref<16x128xf32, #tpu.memory_space<vmem>>) attributes {dimension_semantics = [#tpu.dimension_semantics<parallel>], iteration_bounds = array<i64: 1>, scalar_prefetch = 0 : i64, scratch_operands = 0 : i64, tpu.core_type = #tpu.core_type<tc>, window_params = [{transform_indices = @transform_0, window_bounds = array<i64: 16, 24>}, {transform_indices = @transform_1, window_bounds = array<i64: 16, 64>}, {pipeline_mode = #tpu.pipeline_mode<synchronous>, transform_indices = @transform_2, window_bounds = array<i64: 24, 192>}, {pipeline_mode = #tpu.pipeline_mode<synchronous>, transform_indices = @transform_3, window_bounds = array<i64: 64, 192>}, {pipeline_mode = #tpu.pipeline_mode<synchronous>, transform_indices = @transform_4, window_bounds = array<i64: 1, 192>}, {pipeline_mode = #tpu.pipeline_mode<synchronous>, transform_indices = @transform_5, window_bounds = array<i64: 192, 128>}, {pipeline_mode = #tpu.pipeline_mode<synchronous>, transform_indices = @transform_6, window_bounds = array<i64: 1, 128>}, {pipeline_mode = #tpu.pipeline_mode<synchronous>, transform_indices = @transform_7, window_bounds = array<i64: 128, 128>}, {pipeline_mode = #tpu.pipeline_mode<synchronous>, transform_indices = @transform_8, window_bounds = array<i64: 1, 128>}, {transform_indices = @transform_9, window_bounds = array<i64: 16, 128>}]} {
    %c0 = arith.constant 0 : index
    %c0_0 = arith.constant 0 : index
    %0 = vector.load %arg1[%c0, %c0_0] : memref<16x24xf32, #tpu.memory_space<vmem>>, vector<16x24xf32>
    %1 = arith.truncf %0 : vector<16x24xf32> to vector<16x24xbf16>
    %c0_1 = arith.constant 0 : index
    %c0_2 = arith.constant 0 : index
    %2 = vector.load %arg3[%c0_1, %c0_2] : memref<24x192xf32, #tpu.memory_space<vmem>>, vector<24x192xf32>
    %3 = arith.truncf %2 : vector<24x192xf32> to vector<24x192xbf16>
    %cst = arith.constant dense<0.000000e+00> : vector<16x192xf32>
    %4 = tpu.matmul %1, %3, %cst {dimension_numbers = #tpu.dot_dimension_numbers<[1], [0], [0], [1], [0, 0, 1, 1], [], []>} : vector<16x24xbf16>, vector<24x192xbf16>, vector<16x192xf32> -> vector<16x192xf32>
    %c0_3 = arith.constant 0 : index
    %c0_4 = arith.constant 0 : index
    %5 = vector.load %arg2[%c0_3, %c0_4] : memref<16x64xf32, #tpu.memory_space<vmem>>, vector<16x64xf32>
    %6 = arith.truncf %5 : vector<16x64xf32> to vector<16x64xbf16>
    %c0_5 = arith.constant 0 : index
    %c0_6 = arith.constant 0 : index
    %7 = vector.load %arg4[%c0_5, %c0_6] : memref<64x192xf32, #tpu.memory_space<vmem>>, vector<64x192xf32>
    %8 = arith.truncf %7 : vector<64x192xf32> to vector<64x192xbf16>
    %cst_7 = arith.constant dense<0.000000e+00> : vector<16x192xf32>
    %9 = tpu.matmul %6, %8, %cst_7 {dimension_numbers = #tpu.dot_dimension_numbers<[1], [0], [0], [1], [0, 0, 1, 1], [], []>} : vector<16x64xbf16>, vector<64x192xbf16>, vector<16x192xf32> -> vector<16x192xf32>
    %10 = arith.addf %4, %9 : vector<16x192xf32>
    %c0_8 = arith.constant 0 : index
    %c0_9 = arith.constant 0 : index
    %11 = vector.load %arg5[%c0_8, %c0_9] : memref<1x192xf32, #tpu.memory_space<vmem>>, vector<1x192xf32>
    %12 = vector.broadcast %11 : vector<1x192xf32> to vector<16x192xf32>
    %13 = arith.addf %10, %12 : vector<16x192xf32>
    %cst_10 = arith.constant 0.000000e+00 : f32
    %14 = vector.broadcast %cst_10 : f32 to vector<16x192xf32>
    %15 = arith.cmpf oge, %13, %14 : vector<16x192xf32>
    %cst_11 = arith.constant 2.000000e-01 : f32
    %16 = vector.broadcast %cst_11 : f32 to vector<16x192xf32>
    %17 = arith.mulf %16, %13 : vector<16x192xf32>
    %18 = arith.select %15, %13, %17 : vector<16x192xi1>, vector<16x192xf32>
    %19 = arith.truncf %18 : vector<16x192xf32> to vector<16x192xbf16>
    %c0_12 = arith.constant 0 : index
    %c0_13 = arith.constant 0 : index
    %20 = vector.load %arg6[%c0_12, %c0_13] : memref<192x128xf32, #tpu.memory_space<vmem>>, vector<192x128xf32>
    %21 = arith.truncf %20 : vector<192x128xf32> to vector<192x128xbf16>
    %cst_14 = arith.constant dense<0.000000e+00> : vector<16x128xf32>
    %22 = tpu.matmul %19, %21, %cst_14 {dimension_numbers = #tpu.dot_dimension_numbers<[1], [0], [0], [1], [0, 0, 1, 1], [], []>} : vector<16x192xbf16>, vector<192x128xbf16>, vector<16x128xf32> -> vector<16x128xf32>
    %c0_15 = arith.constant 0 : index
    %c0_16 = arith.constant 0 : index
    %23 = vector.load %arg7[%c0_15, %c0_16] : memref<1x128xf32, #tpu.memory_space<vmem>>, vector<1x128xf32>
    %24 = vector.broadcast %23 : vector<1x128xf32> to vector<16x128xf32>
    %25 = arith.addf %22, %24 : vector<16x128xf32>
    %cst_17 = arith.constant 0.000000e+00 : f32
    %26 = vector.broadcast %cst_17 : f32 to vector<16x128xf32>
    %27 = arith.cmpf oge, %25, %26 : vector<16x128xf32>
    %cst_18 = arith.constant 2.000000e-01 : f32
    %28 = vector.broadcast %cst_18 : f32 to vector<16x128xf32>
    %29 = arith.mulf %28, %25 : vector<16x128xf32>
    %30 = arith.select %27, %25, %29 : vector<16x128xi1>, vector<16x128xf32>
    %31 = arith.truncf %30 : vector<16x128xf32> to vector<16x128xbf16>
    %c0_19 = arith.constant 0 : index
    %c0_20 = arith.constant 0 : index
    %32 = vector.load %arg8[%c0_19, %c0_20] : memref<128x128xf32, #tpu.memory_space<vmem>>, vector<128x128xf32>
    %33 = arith.truncf %32 : vector<128x128xf32> to vector<128x128xbf16>
    %cst_21 = arith.constant dense<0.000000e+00> : vector<16x128xf32>
    %34 = tpu.matmul %31, %33, %cst_21 {dimension_numbers = #tpu.dot_dimension_numbers<[1], [0], [0], [1], [0, 0, 1, 1], [], []>} : vector<16x128xbf16>, vector<128x128xbf16>, vector<16x128xf32> -> vector<16x128xf32>
    %c0_22 = arith.constant 0 : index
    %c0_23 = arith.constant 0 : index
    %35 = vector.load %arg9[%c0_22, %c0_23] : memref<1x128xf32, #tpu.memory_space<vmem>>, vector<1x128xf32>
    %36 = vector.broadcast %35 : vector<1x128xf32> to vector<16x128xf32>
    %37 = arith.addf %34, %36 : vector<16x128xf32>
    %38 = math.tanh %37 : vector<16x128xf32>
    %c0_24 = arith.constant 0 : index
    %c0_25 = arith.constant 0 : index
    %39 = vector.load %arg10[%c0_24, %c0_25] : memref<16x128xf32, #tpu.memory_space<vmem>>, vector<16x128xf32>
    tpu.vector_store %arg10[%c0_24, %c0_25], %38 {strides = array<i32>} : memref<16x128xf32, #tpu.memory_space<vmem>>, vector<16x128xf32>,
    return
  }
  func.func @transform_0(%arg0: i32) -> (i32, i32) {
    %c0_i32 = arith.constant 0 : i32
    %c0_i32_0 = arith.constant 0 : i32
    return %arg0, %c0_i32 : i32, i32
  }
  func.func @transform_1(%arg0: i32) -> (i32, i32) {
    %c0_i32 = arith.constant 0 : i32
    %c0_i32_0 = arith.constant 0 : i32
    return %arg0, %c0_i32 : i32, i32
  }
  func.func @transform_2(%arg0: i32) -> (i32, i32) {
    %c0_i32 = arith.constant 0 : i32
    %c0_i32_0 = arith.constant 0 : i32
    %c0_i32_1 = arith.constant 0 : i32
    return %c0_i32, %c0_i32_0 : i32, i32
  }
  func.func @transform_3(%arg0: i32) -> (i32, i32) {
    %c0_i32 = arith.constant 0 : i32
    %c0_i32_0 = arith.constant 0 : i32
    %c0_i32_1 = arith.constant 0 : i32
    return %c0_i32, %c0_i32_0 : i32, i32
  }
  func.func @transform_4(%arg0: i32) -> (i32, i32) {
    %c0_i32 = arith.constant 0 : i32
    %c0_i32_0 = arith.constant 0 : i32
    %c0_i32_1 = arith.constant 0 : i32
    return %c0_i32, %c0_i32_0 : i32, i32
  }
  func.func @transform_5(%arg0: i32) -> (i32, i32) {
    %c0_i32 = arith.constant 0 : i32
    %c0_i32_0 = arith.constant 0 : i32
    %c0_i32_1 = arith.constant 0 : i32
    return %c0_i32, %c0_i32_0 : i32, i32
  }
  func.func @transform_6(%arg0: i32) -> (i32, i32) {
    %c0_i32 = arith.constant 0 : i32
    %c0_i32_0 = arith.constant 0 : i32
    %c0_i32_1 = arith.constant 0 : i32
    return %c0_i32, %c0_i32_0 : i32, i32
  }
  func.func @transform_7(%arg0: i32) -> (i32, i32) {
    %c0_i32 = arith.constant 0 : i32
    %c0_i32_0 = arith.constant 0 : i32
    %c0_i32_1 = arith.constant 0 : i32
    return %c0_i32, %c0_i32_0 : i32, i32
  }
  func.func @transform_8(%arg0: i32) -> (i32, i32) {
    %c0_i32 = arith.constant 0 : i32
    %c0_i32_0 = arith.constant 0 : i32
    %c0_i32_1 = arith.constant 0 : i32
    return %c0_i32, %c0_i32_0 : i32, i32
  }
  func.func @transform_9(%arg0: i32) -> (i32, i32) {
    %c0_i32 = arith.constant 0 : i32
    %c0_i32_0 = arith.constant 0 : i32
    return %arg0, %c0_i32 : i32, i32
  }
}

</mosaic_0001>

<llo_original>
// kernel: tpu_custom_call.1
$region0: #{tpu_custom_call.1}
  #allocation0 [shape = 'u32[]', space=smem, size = 0x4, offset = 0x4, fixed_abs, tag = 'smem constant byte address 0x4 - core index']
  #allocation1 [shape = 'u32[144,128]{1,0:T(1,128)}', space=vmem, size = 0x12000, scoped, tag = 'internal scratch']
  %s0 = inlined_call_operand.hbm [shape: f32[16,24], index: 0, kind: input, shape index: {}]
  %s1 = inlined_call_operand.hbm [shape: f32[16,64], index: 1, kind: input, shape index: {}]
  %s2 = inlined_call_operand.hbm [shape: f32[24,192], index: 2, kind: input, shape index: {}]
  %s3 = inlined_call_operand.hbm [shape: f32[64,192], index: 3, kind: input, shape index: {}]
  %s4 = inlined_call_operand.vmem [shape: f32[1,192], index: 4, kind: input, shape index: {}]
  %s5 = inlined_call_operand.hbm [shape: f32[192,128], index: 5, kind: input, shape index: {}]
  %s6 = inlined_call_operand.vmem [shape: f32[1,128], index: 6, kind: input, shape index: {}]
  %s7 = inlined_call_operand.hbm [shape: f32[128,128], index: 7, kind: input, shape index: {}]
  %s8 = inlined_call_operand.vmem [shape: f32[1,128], index: 8, kind: input, shape index: {}]
  %s9 = inlined_call_operand.hbm [shape: f32[16,128], index: 9, kind: output, shape index: {}]
  %s10 = sld [smem:[#allocation0]]
  $region70: #{tpu_custom_call.1} parent=0
    _
  %s12 = ssub.s32 1, %s10
  %s13 = scalar_select 0, %s12, %s10
  $region1: #{tpu_custom_call.1} parent=0
    #allocation2 [shape = 'u8[8192]{0}', space=vmem, size = 0x2000, scoped, tag = 'input window, operand 0, single buffered']
    #allocation3 [shape = 's32[1]{0}', space=sflag, size = 0x4, scoped, tag = 'scoped memory for tpu_custom_call.1']
    #allocation4 [shape = 's32[1]{0}', space=sflag, size = 0x4, scoped, tag = 'scoped memory for tpu_custom_call.1']
    #allocation5 [shape = 'u8[8192]{0}', space=vmem, size = 0x2000, scoped, tag = 'input window, operand 1, single buffered']
    #allocation6 [shape = 's32[1]{0}', space=sflag, size = 0x4, scoped, tag = 'scoped memory for tpu_custom_call.1']
    #allocation7 [shape = 'u8[24576]{0}', space=vmem, size = 0x6000, scoped, tag = 'input window, operand 2, single buffered']
    #allocation8 [shape = 'u8[65536]{0}', space=vmem, size = 0x10000, scoped, tag = 'input window, operand 3, single buffered']
    #allocation9 [shape = 's32[1]{0}', space=sflag, size = 0x4, scoped, tag = 'scoped memory for tpu_custom_call.1']
    #allocation10 [shape = 'u8[98304]{0}', space=vmem, size = 0x18000, scoped, tag = 'input window, operand 5, single buffered']
    #allocation11 [shape = 'u8[65536]{0}', space=vmem, size = 0x10000, scoped, tag = 'input window, operand 7, single buffered']
    #allocation12 [shape = 's32[1]{0}', space=sflag, size = 0x4, scoped, tag = 'scoped memory for tpu_custom_call.1']
    #allocation13 [shape = 'u8[8192]{0}', space=vmem, size = 0x2000, scoped, tag = 'output window, operand 0, single buffered']
    %14 = vsyncpa [#allocation3], 0
    %15 = vsyncpa [#allocation6], 0
    %16 = vsyncpa [#allocation9], 0
    %17 = vsyncpa [#allocation12], 0
    %18 = vsyncpa [#allocation4], 0
    // Predicated region
    $region2: #{tpu_custom_call.1} parent=1 // pred_check
      _
    $region3: #{tpu_custom_call.1} parent=1 // pred_check_branch
      %20 = sbr.rel (0) target = $region5
    $region4: #{tpu_custom_call.1} parent=1 // pred_region
      %s22 = ssub.s32 256, 256
      %23 = vsyncadd [#allocation3], %s22
      %s24 = sshll.u32 [#allocation2], 4
      %s25 = int_to_ptr.vmem [resolvable:$true] %s24
      %30 = dma.hbm_to_vmem [thread:$0]  %s0, 256, %s25, [#allocation3], 128, 128, 8
    $region5: #{tpu_custom_call.1} parent=1 // pred_fallthru
      _
    // Predicated region
    $region6: #{tpu_custom_call.1} parent=1 // pred_check
      _
    $region7: #{tpu_custom_call.1} parent=1 // pred_check_branch
      %32 = sbr.rel (0) target = $region9
    $region8: #{tpu_custom_call.1} parent=1 // pred_region
      %s34 = ssub.s32 256, 256
      %35 = vsyncadd [#allocation6], %s34
      %s36 = sshll.u32 [#allocation5], 4
      %s37 = int_to_ptr.vmem [resolvable:$true] %s36
      %42 = dma.hbm_to_vmem [thread:$0]  %s1, 256, %s37, [#allocation6], 128, 128, 8
    $region9: #{tpu_custom_call.1} parent=1 // pred_fallthru
      _
    // Predicated region
    $region10: #{tpu_custom_call.1} parent=1 // pred_check
      _
    $region11: #{tpu_custom_call.1} parent=1 // pred_check_branch
      %44 = sbr.rel (0) target = $region13
    $region12: #{tpu_custom_call.1} parent=1 // pred_region
      %s46 = ssub.s32 768, 768
      %47 = vsyncadd [#allocation6], %s46
      %s48 = sshll.u32 [#allocation7], 4
      %s49 = int_to_ptr.vmem [resolvable:$true] %s48
      %54 = dma.hbm_to_vmem [thread:$0]  %s2, 768, %s49, [#allocation6], 256, 256, 16
    $region13: #{tpu_custom_call.1} parent=1 // pred_fallthru
      _
    // Predicated region
    $region14: #{tpu_custom_call.1} parent=1 // pred_check
      _
    $region15: #{tpu_custom_call.1} parent=1 // pred_check_branch
      %56 = sbr.rel (0) target = $region17
    $region16: #{tpu_custom_call.1} parent=1 // pred_region
      %s58 = ssub.s32 2048, 2048
      %59 = vsyncadd [#allocation9], %s58
      %s60 = sshll.u32 [#allocation8], 4
      %s61 = int_to_ptr.vmem [resolvable:$true] %s60
      %66 = dma.hbm_to_vmem [thread:$0]  %s3, 2048, %s61, [#allocation9], 256, 256, 16
    $region17: #{tpu_custom_call.1} parent=1 // pred_fallthru
      _
    // Predicated region
    $region18: #{tpu_custom_call.1} parent=1 // pred_check
      _
    $region19: #{tpu_custom_call.1} parent=1 // pred_check_branch
      %68 = sbr.rel (0) target = $region21
    $region20: #{tpu_custom_call.1} parent=1 // pred_region
      _
    $region21: #{tpu_custom_call.1} parent=1 // pred_fallthru
      _
    // Predicated region
    $region22: #{tpu_custom_call.1} parent=1 // pred_check
      _
    $region23: #{tpu_custom_call.1} parent=1 // pred_check_branch
      %70 = sbr.rel (0) target = $region25
    $region24: #{tpu_custom_call.1} parent=1 // pred_region
      %s72 = ssub.s32 3072, 3072
      %73 = vsyncadd [#allocation9], %s72
      %s74 = sshll.u32 [#allocation10], 4
      %s75 = int_to_ptr.vmem [resolvable:$true] %s74
      %80 = dma.hbm_to_vmem [thread:$0]  %s5, 3072, %s75, [#allocation9], 128, 128, 8
    $region25: #{tpu_custom_call.1} parent=1 // pred_fallthru
      _
    // Predicated region
    $region26: #{tpu_custom_call.1} parent=1 // pred_check
      _
    $region27: #{tpu_custom_call.1} parent=1 // pred_check_branch
      %82 = sbr.rel (0) target = $region29
    $region28: #{tpu_custom_call.1} parent=1 // pred_region
      _
    $region29: #{tpu_custom_call.1} parent=1 // pred_fallthru
      _
    // Predicated region
    $region30: #{tpu_custom_call.1} parent=1 // pred_check
      _
    $region31: #{tpu_custom_call.1} parent=1 // pred_check_branch
      %84 = sbr.rel (0) target = $region33
    $region32: #{tpu_custom_call.1} parent=1 // pred_region
      %s86 = ssub.s32 2048, 2048
      %87 = vsyncadd [#allocation12], %s86
      %s88 = sshll.u32 [#allocation11], 4
      %s89 = int_to_ptr.vmem [resolvable:$true] %s88
      %94 = dma.hbm_to_vmem [thread:$0]  %s7, 2048, %s89, [#allocation12], 128, 128, 8
    $region33: #{tpu_custom_call.1} parent=1 // pred_fallthru
      _
    // Predicated region
    $region34: #{tpu_custom_call.1} parent=1 // pred_check
      _
    $region35: #{tpu_custom_call.1} parent=1 // pred_check_branch
      %96 = sbr.rel (0) target = $region37
    $region36: #{tpu_custom_call.1} parent=1 // pred_region
      _
    $region37: #{tpu_custom_call.1} parent=1 // pred_fallthru
      _
    // Predicated region
    $region38: #{tpu_custom_call.1} parent=1 // pred_check
      _
    $region39: #{tpu_custom_call.1} parent=1 // pred_check_branch
      %98 = sbr.rel (0) target = $region41
    $region40: #{tpu_custom_call.1} parent=1 // pred_region
      %99 = dma.done [#allocation3], 256
    $region41: #{tpu_custom_call.1} parent=1 // pred_fallthru
      _
    // Predicated region
    $region42: #{tpu_custom_call.1} parent=1 // pred_check
      _
    $region43: #{tpu_custom_call.1} parent=1 // pred_check_branch
      %101 = sbr.rel (0) target = $region45
    $region44: #{tpu_custom_call.1} parent=1 // pred_region
      %102 = dma.done [#allocation6], 256
    $region45: #{tpu_custom_call.1} parent=1 // pred_fallthru
      _
    // Predicated region
    $region46: #{tpu_custom_call.1} parent=1 // pred_check
      _
    $region47: #{tpu_custom_call.1} parent=1 // pred_check_branch
      %104 = sbr.rel (0) target = $region49
    $region48: #{tpu_custom_call.1} parent=1 // pred_region
      %105 = dma.done [#allocation6], 768
    $region49: #{tpu_custom_call.1} parent=1 // pred_fallthru
      _
    // Predicated region
    $region50: #{tpu_custom_call.1} parent=1 // pred_check
      _
    $region51: #{tpu_custom_call.1} parent=1 // pred_check_branch
      %107 = sbr.rel (0) target = $region53
    $region52: #{tpu_custom_call.1} parent=1 // pred_region
      %108 = dma.done [#allocation9], 2048
    $region53: #{tpu_custom_call.1} parent=1 // pred_fallthru
      _
    // Predicated region
    $region54: #{tpu_custom_call.1} parent=1 // pred_check
      _
    $region55: #{tpu_custom_call.1} parent=1 // pred_check_branch
      %110 = sbr.rel (0) target = $region57
    $region56: #{tpu_custom_call.1} parent=1 // pred_region
      %111 = dma.done [#allocation9], 3072
    $region57: #{tpu_custom_call.1} parent=1 // pred_fallthru
      _
    // Predicated region
    $region58: #{tpu_custom_call.1} parent=1 // pred_check
      _
    $region59: #{tpu_custom_call.1} parent=1 // pred_check_branch
      %113 = sbr.rel (0) target = $region61
    $region60: #{tpu_custom_call.1} parent=1 // pred_region
      %114 = dma.done [#allocation12], 2048
    $region61: #{tpu_custom_call.1} parent=1 // pred_fallthru
      _
    %v116 = vld [vmem:[#allocation2] sm:$0xff]
    %v117 = vld [vmem:[#allocation2 + $0x8] sm:$0xff]
    %v118 = vpack.c.bf16 %v117, %v116
    %v119 = vld [vmem:[#allocation7] sm:$0xff]
    %v120 = vld [vmem:[#allocation7 + $0x8] sm:$0xff]
    %v121 = vld [vmem:[#allocation7 + $0x10] sm:$0xff]
    %v122 = vld [vmem:[#allocation7 + $0x18] sm:$0xff]
    %v123 = vld [vmem:[#allocation7 + $0x20] sm:$0xff]
    %v124 = vld [vmem:[#allocation7 + $0x28] sm:$0xff]
    %v125 = vpack.c.bf16 %v121, %v119
    %v126 = vpack.c.bf16 %v122, %v120
    %v127 = vpack.c.bf16 %v123, %v123
    %v128 = vpack.c.bf16 %v124, %v124
    %v129 = vld [vmem:[#allocation5] sm:$0xff]
    %v130 = vld [vmem:[#allocation5 + $0x8] sm:$0xff]
    %v131 = vpack.c.bf16 %v130, %v129
    %v132 = vld [vmem:[#allocation8] sm:$0xff]
    %v133 = vld [vmem:[#allocation8 + $0x8] sm:$0xff]
    %v134 = vld [vmem:[#allocation8 + $0x10] sm:$0xff]
    %v135 = vld [vmem:[#allocation8 + $0x18] sm:$0xff]
    %v136 = vld [vmem:[#allocation8 + $0x20] sm:$0xff]
    %v137 = vld [vmem:[#allocation8 + $0x28] sm:$0xff]
    %v138 = vld [vmem:[#allocation8 + $0x30] sm:$0xff]
    %v139 = vld [vmem:[#allocation8 + $0x38] sm:$0xff]
    %v140 = vld [vmem:[#allocation8 + $0x40] sm:$0xff]
    %v141 = vld [vmem:[#allocation8 + $0x48] sm:$0xff]
    %v142 = vld [vmem:[#allocation8 + $0x50] sm:$0xff]
    %v143 = vld [vmem:[#allocation8 + $0x58] sm:$0xff]
    %v144 = vld [vmem:[#allocation8 + $0x60] sm:$0xff]
    %v145 = vld [vmem:[#allocation8 + $0x68] sm:$0xff]
    %v146 = vld [vmem:[#allocation8 + $0x70] sm:$0xff]
    %v147 = vld [vmem:[#allocation8 + $0x78] sm:$0xff]
    %v148 = vpack.c.bf16 %v134, %v132
    %v149 = vpack.c.bf16 %v135, %v133
    %v150 = vpack.c.bf16 %v138, %v136
    %v151 = vpack.c.bf16 %v139, %v137
    %v152 = vpack.c.bf16 %v142, %v140
    %v153 = vpack.c.bf16 %v143, %v141
    %v154 = vpack.c.bf16 %v146, %v144
    %v155 = vpack.c.bf16 %v147, %v145
    %vm156 = vcmask 523264
    %v158 = vsel %vm156, %v131, 0
    %160 = vmatprep.subr.bf16.mxu0 0
    %161 = vmatpush1.bf16.msra.mxu0 0
    %162 = vmatprep.subr.bf16.mxu0 0
    %163 = vmatpush1.bf16.msra.mxu0 0
    %164 = vmatprep.subr.bf16.mxu0 0
    %165 = vmatpush1.bf16.msra.mxu0 0
    %166 = vmatprep.subr.bf16.mxu0 0
    %167 = vmatpush1.bf16.msra.mxu0 0
    %168 = vmatprep.subr.bf16.mxu0 %v155
    %169 = vmatpush1.bf16.msra.mxu0 %v154
    %170 = vmatprep.subr.bf16.mxu0 %v153
    %171 = vmatpush1.bf16.msra.mxu0 %v152
    %172 = vmatprep.subr.bf16.mxu0 %v151
    %173 = vmatpush1.bf16.msra.mxu0 %v150
    %174 = vmatprep.subr.bf16.mxu0 %v149
    %175 = vmatpush1.bf16.msra.mxu0 %v148
    %176 = vmatprep.subr.bf16.mxu0 0
    %177 = vmatpush2.bf16.msra.mxu0 0
    %178 = vmatprep.subr.bf16.mxu0 0
    %179 = vmatpush2.bf16.msra.mxu0 0
    %180 = vmatprep.subr.bf16.mxu0 0
    %181 = vmatpush2.bf16.msra.mxu0 0
    %182 = vmatprep.subr.bf16.mxu0 0
    %183 = vmatpush2.bf16.msra.mxu0 0
    %184 = vmatprep.subr.bf16.mxu0 0
    %185 = vmatpush2.bf16.msra.mxu0 0
    %186 = vmatprep.subr.bf16.mxu0 0
    %187 = vmatpush2.bf16.msra.mxu0 0
    %188 = vmatprep.subr.bf16.mxu0 0
    %189 = vmatpush2.bf16.msra.mxu0 0
    %190 = vmatprep.subr.bf16.mxu0 0
    %191 = vmatpush2.bf16.msra.mxu0 0
    %192 = vmatprep.mubr.bf16.mxu0 0
    %193 = vmatmul.mubr.bf16.gmra.mxu0 %v158
    %v194 = vpop.f32.mrf.mxu0
    %v195 = vadd.f32 0.0, %v194
    %v196 = vpop.f32.mrf.mxu0
    %v197 = vadd.f32 0.0, %v196
    %v198 = vpop.f32.mrf.mxu0
    %v199 = vadd.f32 0.0, %v198
    %v200 = vpop.f32.mrf.mxu0
    %v201 = vadd.f32 0.0, %v200
    %202 = vdwg.mxu0
    %vm203 = vcmask 195584
    %v205 = vsel %vm203, %v118, 0
    %vm207 = vcmask 1043456
    %v209 = vsel %vm207, %v127, 0
    %v212 = vsel %vm207, %v128, 0
    %214 = vmatprep.subr.bf16.mxu0 0
    %215 = vmatpush1.bf16.msra.mxu0 0
    %216 = vmatprep.subr.bf16.mxu0 0
    %217 = vmatpush1.bf16.msra.mxu0 0
    %218 = vmatprep.subr.bf16.mxu0 0
    %219 = vmatpush1.bf16.msra.mxu0 0
    %220 = vmatprep.subr.bf16.mxu0 0
    %221 = vmatpush1.bf16.msra.mxu0 0
    %222 = vmatprep.subr.bf16.mxu0 0
    %223 = vmatpush1.bf16.msra.mxu0 0
    %224 = vmatprep.subr.bf16.mxu0 0
    %225 = vmatpush1.bf16.msra.mxu0 0
    %226 = vmatprep.subr.bf16.mxu0 %v212
    %227 = vmatpush1.bf16.msra.mxu0 %v209
    %228 = vmatprep.subr.bf16.mxu0 %v126
    %229 = vmatpush1.bf16.msra.mxu0 %v125
    %230 = vmatprep.subr.bf16.mxu0 0
    %231 = vmatpush2.bf16.msra.mxu0 0
    %232 = vmatprep.subr.bf16.mxu0 0
    %233 = vmatpush2.bf16.msra.mxu0 0
    %234 = vmatprep.subr.bf16.mxu0 0
    %235 = vmatpush2.bf16.msra.mxu0 0
    %236 = vmatprep.subr.bf16.mxu0 0
    %237 = vmatpush2.bf16.msra.mxu0 0
    %238 = vmatprep.subr.bf16.mxu0 0
    %239 = vmatpush2.bf16.msra.mxu0 0
    %240 = vmatprep.subr.bf16.mxu0 0
    %241 = vmatpush2.bf16.msra.mxu0 0
    %242 = vmatprep.subr.bf16.mxu0 0
    %243 = vmatpush2.bf16.msra.mxu0 0
    %244 = vmatprep.subr.bf16.mxu0 0
    %245 = vmatpush2.bf16.msra.mxu0 0
    %246 = vmatprep.mubr.bf16.mxu0 0
    %247 = vmatmul.mubr.bf16.gmra.mxu0 %v205
    %v248 = vpop.f32.mrf.mxu0
    %v249 = vadd.f32 %v195, %v248
    %v250 = vpop.f32.mrf.mxu0
    %v251 = vadd.f32 %v197, %v250
    %v252 = vpop.f32.mrf.mxu0
    %v253 = vadd.f32 %v199, %v252
    %v254 = vpop.f32.mrf.mxu0
    %v255 = vadd.f32 %v201, %v254
    %256 = vdwg.mxu0
    %v257 = vld [vmem:[%s4] sm:$0x3]
    %v259 = vlaneseq
    %v260 = vshrl.u32 %v259, 7
    %v261 = vsub.s32 0, %v260
    %v262 = vrot.slane %v257, %v261
    %v263 = vlaneseq
    %v264 = vshrl.u32 %v263, 7
    %v265 = vsub.s32 1, %v264
    %v266 = vrot.slane %v257, %v265
    %v269 = vadd.f32 %v249, %v262
    %v270 = vadd.f32 %v251, %v266
    %v271 = vadd.f32 %v253, %v262
    %v272 = vadd.f32 %v255, %v266
    %vm273 = vcmp.ge.f32.partialorder %v269, 0.0
    %vm274 = vcmp.ge.f32.partialorder %v270, 0.0
    %vm275 = vcmp.ge.f32.partialorder %v271, 0.0
    %vm276 = vcmp.ge.f32.partialorder %v272, 0.0
    %v277 = vmul.f32 %v269, 0.2
    %v278 = vmul.f32 %v270, 0.2
    %v279 = vmul.f32 %v271, 0.2
    %v280 = vmul.f32 %v272, 0.2
    %v281 = vsel %vm273, %v269, %v277
    %v282 = vsel %vm274, %v270, %v278
    %v283 = vsel %vm275, %v271, %v279
    %v284 = vsel %vm276, %v272, %v280
    %v285 = vpack.c.bf16 %v283, %v281
    %v286 = vpack.c.bf16 %v284, %v282
    %v287 = vld [vmem:[#allocation10] sm:$0xff]
    %v288 = vld [vmem:[#allocation10 + $0x8] sm:$0xff]
    %v289 = vld [vmem:[#allocation10 + $0x10] sm:$0xff]
    %v290 = vld [vmem:[#allocation10 + $0x18] sm:$0xff]
    %v291 = vld [vmem:[#allocation10 + $0x20] sm:$0xff]
    %v292 = vld [vmem:[#allocation10 + $0x28] sm:$0xff]
    %v293 = vld [vmem:[#allocation10 + $0x30] sm:$0xff]
    %v294 = vld [vmem:[#allocation10 + $0x38] sm:$0xff]
    %v295 = vld [vmem:[#allocation10 + $0x40] sm:$0xff]
    %v296 = vld [vmem:[#allocation10 + $0x48] sm:$0xff]
    %v297 = vld [vmem:[#allocation10 + $0x50] sm:$0xff]
    %v298 = vld [vmem:[#allocation10 + $0x58] sm:$0xff]
    %v299 = vld [vmem:[#allocation10 + $0x60] sm:$0xff]
    %v300 = vld [vmem:[#allocation10 + $0x68] sm:$0xff]
    %v301 = vld [vmem:[#allocation10 + $0x70] sm:$0xff]
    %v302 = vld [vmem:[#allocation10 + $0x78] sm:$0xff]
    %v303 = vld [vmem:[#allocation10 + $0x80] sm:$0xff]
    %v304 = vld [vmem:[#allocation10 + $0x88] sm:$0xff]
    %v305 = vld [vmem:[#allocation10 + $0x90] sm:$0xff]
    %v306 = vld [vmem:[#allocation10 + $0x98] sm:$0xff]
    %v307 = vld [vmem:[#allocation10 + $0xa0] sm:$0xff]
    %v308 = vld [vmem:[#allocation10 + $0xa8] sm:$0xff]
    %v309 = vld [vmem:[#allocation10 + $0xb0] sm:$0xff]
    %v310 = vld [vmem:[#allocation10 + $0xb8] sm:$0xff]
    %v311 = vpack.c.bf16 %v288, %v287
    %v312 = vpack.c.bf16 %v290, %v289
    %v313 = vpack.c.bf16 %v292, %v291
    %v314 = vpack.c.bf16 %v294, %v293
    %v315 = vpack.c.bf16 %v296, %v295
    %v316 = vpack.c.bf16 %v298, %v297
    %v317 = vpack.c.bf16 %v300, %v299
    %v318 = vpack.c.bf16 %v302, %v301
    %v319 = vpack.c.bf16 %v304, %v303
    %v320 = vpack.c.bf16 %v306, %v305
    %v321 = vpack.c.bf16 %v308, %v307
    %v322 = vpack.c.bf16 %v310, %v309
    %v323 = vld [vmem:[%s6] sm:$0x1]
    %v325 = vlaneseq
    %v326 = vshrl.u32 %v325, 7
    %v327 = vsub.s32 0, %v326
    %v328 = vrot.slane %v323, %v327
    %v331 = vsel %vm156, %v286, 0
    %333 = vmatprep.subr.bf16.mxu0 0
    %334 = vmatpush1.bf16.msra.mxu0 %v318
    %335 = vmatprep.subr.bf16.mxu0 0
    %336 = vmatpush1.bf16.msra.mxu0 %v317
    %337 = vmatprep.subr.bf16.mxu0 0
    %338 = vmatpush1.bf16.msra.mxu0 %v316
    %339 = vmatprep.subr.bf16.mxu0 0
    %340 = vmatpush1.bf16.msra.mxu0 %v315
    %341 = vmatprep.subr.bf16.mxu0 0
    %342 = vmatpush1.bf16.msra.mxu0 %v314
    %343 = vmatprep.subr.bf16.mxu0 0
    %344 = vmatpush1.bf16.msra.mxu0 %v313
    %345 = vmatprep.subr.bf16.mxu0 0
    %346 = vmatpush1.bf16.msra.mxu0 %v312
    %347 = vmatprep.subr.bf16.mxu0 0
    %348 = vmatpush1.bf16.msra.mxu0 %v311
    %349 = vmatprep.subr.bf16.mxu0 0
    %350 = vmatpush2.bf16.msra.mxu0 0
    %351 = vmatprep.subr.bf16.mxu0 0
    %352 = vmatpush2.bf16.msra.mxu0 0
    %353 = vmatprep.subr.bf16.mxu0 0
    %354 = vmatpush2.bf16.msra.mxu0 0
    %355 = vmatprep.subr.bf16.mxu0 0
    %356 = vmatpush2.bf16.msra.mxu0 0
    %357 = vmatprep.subr.bf16.mxu0 0
    %358 = vmatpush2.bf16.msra.mxu0 %v322
    %359 = vmatprep.subr.bf16.mxu0 0
    %360 = vmatpush2.bf16.msra.mxu0 %v321
    %361 = vmatprep.subr.bf16.mxu0 0
    %362 = vmatpush2.bf16.msra.mxu0 %v320
    %363 = vmatprep.subr.bf16.mxu0 0
    %364 = vmatpush2.bf16.msra.mxu0 %v319
    %365 = vmatprep.mubr.bf16.mxu0 %v331
    %366 = vmatmul.mubr.bf16.gmra.mxu0 %v285
    %v367 = vpop.f32.mrf.mxu0
    %v368 = vadd.f32 %v328, %v367
    %v369 = vpop.f32.mrf.mxu0
    %v370 = vpop.f32.mrf.mxu0
    %v371 = vadd.f32 %v328, %v370
    %v372 = vpop.f32.mrf.mxu0
    %373 = vdwg.mxu0
    %vm374 = vcmp.ge.f32.partialorder %v368, 0.0
    %vm375 = vcmp.ge.f32.partialorder %v371, 0.0
    %v376 = vmul.f32 %v368, 0.2
    %v377 = vmul.f32 %v371, 0.2
    %v378 = vsel %vm374, %v368, %v376
    %v379 = vsel %vm375, %v371, %v377
    %v380 = vpack.c.bf16 %v379, %v378
    %v381 = vld [vmem:[#allocation11] sm:$0xff]
    %v382 = vld [vmem:[#allocation11 + $0x8] sm:$0xff]
    %v383 = vld [vmem:[#allocation11 + $0x10] sm:$0xff]
    %v384 = vld [vmem:[#allocation11 + $0x18] sm:$0xff]
    %v385 = vld [vmem:[#allocation11 + $0x20] sm:$0xff]
    %v386 = vld [vmem:[#allocation11 + $0x28] sm:$0xff]
    %v387 = vld [vmem:[#allocation11 + $0x30] sm:$0xff]
    %v388 = vld [vmem:[#allocation11 + $0x38] sm:$0xff]
    %v389 = vld [vmem:[#allocation11 + $0x40] sm:$0xff]
    %v390 = vld [vmem:[#allocation11 + $0x48] sm:$0xff]
    %v391 = vld [vmem:[#allocation11 + $0x50] sm:$0xff]
    %v392 = vld [vmem:[#allocation11 + $0x58] sm:$0xff]
    %v393 = vld [vmem:[#allocation11 + $0x60] sm:$0xff]
    %v394 = vld [vmem:[#allocation11 + $0x68] sm:$0xff]
    %v395 = vld [vmem:[#allocation11 + $0x70] sm:$0xff]
    %v396 = vld [vmem:[#allocation11 + $0x78] sm:$0xff]
    %v397 = vpack.c.bf16 %v382, %v381
    %v398 = vpack.c.bf16 %v384, %v383
    %v399 = vpack.c.bf16 %v386, %v385
    %v400 = vpack.c.bf16 %v388, %v387
    %v401 = vpack.c.bf16 %v390, %v389
    %v402 = vpack.c.bf16 %v392, %v391
    %v403 = vpack.c.bf16 %v394, %v393
    %v404 = vpack.c.bf16 %v396, %v395
    %v405 = vld [vmem:[%s8] sm:$0x1]
    %v407 = vlaneseq
    %v408 = vshrl.u32 %v407, 7
    %v409 = vsub.s32 0, %v408
    %v410 = vrot.slane %v405, %v409
    %412 = vmatprep.subr.bf16.mxu0 0
    %413 = vmatpush1.bf16.msra.mxu0 %v404
    %414 = vmatprep.subr.bf16.mxu0 0
    %415 = vmatpush1.bf16.msra.mxu0 %v403
    %416 = vmatprep.subr.bf16.mxu0 0
    %417 = vmatpush1.bf16.msra.mxu0 %v402
    %418 = vmatprep.subr.bf16.mxu0 0
    %419 = vmatpush1.bf16.msra.mxu0 %v401
    %420 = vmatprep.subr.bf16.mxu0 0
    %421 = vmatpush1.bf16.msra.mxu0 %v400
    %422 = vmatprep.subr.bf16.mxu0 0
    %423 = vmatpush1.bf16.msra.mxu0 %v399
    %424 = vmatprep.subr.bf16.mxu0 0
    %425 = vmatpush1.bf16.msra.mxu0 %v398
    %426 = vmatprep.subr.bf16.mxu0 0
    %427 = vmatpush1.bf16.msra.mxu0 %v397
    %428 = vmatprep.subr.bf16.mxu0 0
    %429 = vmatpush2.bf16.msra.mxu0 0
    %430 = vmatprep.subr.bf16.mxu0 0
    %431 = vmatpush2.bf16.msra.mxu0 0
    %432 = vmatprep.subr.bf16.mxu0 0
    %433 = vmatpush2.bf16.msra.mxu0 0
    %434 = vmatprep.subr.bf16.mxu0 0
    %435 = vmatpush2.bf16.msra.mxu0 0
    %436 = vmatprep.subr.bf16.mxu0 0
    %437 = vmatpush2.bf16.msra.mxu0 0
    %438 = vmatprep.subr.bf16.mxu0 0
    %439 = vmatpush2.bf16.msra.mxu0 0
    %440 = vmatprep.subr.bf16.mxu0 0
    %441 = vmatpush2.bf16.msra.mxu0 0
    %442 = vmatprep.subr.bf16.mxu0 0
    %443 = vmatpush2.bf16.msra.mxu0 0
    %444 = vmatprep.mubr.bf16.mxu0 0
    %445 = vmatmul.mubr.bf16.gmra.mxu0 %v380
    %v446 = vpop.f32.mrf.mxu0
    %v447 = vadd.f32 %v410, %v446
    %v448 = vpop.f32.mrf.mxu0
    %v449 = vpop.f32.mrf.mxu0
    %v450 = vadd.f32 %v410, %v449
    %v451 = vpop.f32.mrf.mxu0
    %452 = vdwg.mxu0
    %v453 = vtanh.pop %v447
    %v454 = vtanh.pop %v450
    %455 = vst [vmem:[#allocation13] sm:$0xff] %v453
    %456 = vst [vmem:[#allocation13 + $0x8] sm:$0xff] %v454
    // Predicated region
    $region62: #{tpu_custom_call.1} parent=1 // pred_check
      _
    $region63: #{tpu_custom_call.1} parent=1 // pred_check_branch
      %458 = sbr.rel (0) target = $region65
    $region64: #{tpu_custom_call.1} parent=1 // pred_region
      %s460 = ssub.s32 256, 256
      %461 = vsyncadd [#allocation4], %s460
      %s462 = sshll.u32 [#allocation13], 4
      %s463 = int_to_ptr.vmem [resolvable:$true] %s462
      %468 = dma.vmem_to_hbm [thread:$0]  %s463, 256, %s9, [#allocation4], 128, 128, 8
    $region65: #{tpu_custom_call.1} parent=1 // pred_fallthru
      _
    // Predicated region
    $region66: #{tpu_custom_call.1} parent=1 // pred_check
      _
    $region67: #{tpu_custom_call.1} parent=1 // pred_check_branch
      %470 = sbr.rel (0) target = $region69
    $region68: #{tpu_custom_call.1} parent=1 // pred_region
      %471 = dma.done [#allocation4], 256
    $region69: #{tpu_custom_call.1} parent=1 // pred_fallthru
      _
    %472 = vsyncpa [#allocation3], 1
    %473 = vsyncpa [#allocation6], 1
    %474 = vsyncpa [#allocation9], 1
    %475 = vsyncpa [#allocation12], 1
    %476 = vsyncpa [#allocation4], 1

</llo_original>
